<compile_context>
chip_gen: v7x
topology: tpu7x:2x2x1
jax: 0.10.0
libtpu: 0.0.40
codegen_flags: <defaults>
</compile_context>

<pallas_src>
import jax
import jax.numpy as jnp
from jax import lax
from jax.experimental import pallas as pl
from jax.experimental.pallas import tpu as pltpu


def _transition_kernel(x_ref, w1_ref, b1_ref, w2t_ref, b2_ref, out_ref):
    """One batch tile:  out[K, TB] = (tanh(x @ W1 + b1) @ W2 + b2)^T."""
    # [TB, D] @ [D, H] -> [TB, H], f32 accumulation on the MXU.
    h = jnp.tanh(
        jnp.dot(x_ref[...], w1_ref[...], preferred_element_type=jnp.float32)
        + b1_ref[...]                                    # [1, H] sublane-broadcast
    )                                                    # [TB, H] f32
    # [K, H] x [TB, H] contracted on H -> [K, TB]; the movedim(-1, 0) transpose
    # comes out of the MXU directly (no XLU transpose, no materialized copy).
    heads_t = lax.dot_general(
        w2t_ref[...], h.astype(w2t_ref.dtype),
        dimension_numbers=(((1,), (1,)), ((), ())),
        preferred_element_type=jnp.float32,
    ) + b2_ref[...]                                      # [K, 1] lane-broadcast
    out_ref[...] = heads_t.astype(out_ref.dtype)


def transition_function(x, params, k=None, *, compute_dtype=jnp.float32,
                        block_b=None):
    """TransitionFunction.forward(x, k). `k` is ignored (OneToManyNetwork)."""
    del k
    w1, b1, w2, b2 = params
    B, D = x.shape
    H = w1.shape[1]
    K = w2.shape[1]

    # Batch tile: largest multiple of 128 dividing B (lane-dense [K, TB] output
    # stores); otherwise take the whole batch as a single block.
    if block_b is None:
        block_b = B
        for tb in (1024, 512, 256, 128):
            if B % tb == 0:
                block_b = tb
                break
    assert B % block_b == 0, (B, block_b)
    grid = (B // block_b,)

    # MXU operands in compute_dtype (bf16 halves HBM/VMEM traffic on v6e/v7x);
    # biases, tanh and accumulation stay f32.
    xc = x.astype(compute_dtype)
    w1c = w1.astype(compute_dtype)                      # [D, H]
    w2t = w2.T.astype(compute_dtype)                    # [K, H]  (pre-transposed)
    b1c = b1.reshape(1, H).astype(jnp.float32)          # [1, H]
    b2c = b2.reshape(K, 1).astype(jnp.float32)          # [K, 1]

    itemsize = jnp.dtype(compute_dtype).itemsize
    cost = pl.CostEstimate(
        flops=2 * B * (D * H + H * K),
        transcendentals=B * H,
        bytes_accessed=(B * D + D * H + K * H) * itemsize
        + (H + K) * 4 + K * B * 4,
    )

    return pl.pallas_call(
        _transition_kernel,
        out_shape=jax.ShapeDtypeStruct((K, B), jnp.float32),
        grid=grid,
        in_specs=[
            pl.BlockSpec((block_b, D), lambda i: (i, 0)),   # x batch tile
            pl.BlockSpec((D, H), lambda i: (0, 0)),         # W1   (resident)
            pl.BlockSpec((1, H), lambda i: (0, 0)),         # b1   (resident)
            pl.BlockSpec((K, H), lambda i: (0, 0)),         # W2^T (resident)
            pl.BlockSpec((K, 1), lambda i: (0, 0)),         # b2   (resident)
        ],
        out_specs=pl.BlockSpec((K, block_b), lambda i: (0, i)),
        compiler_params=pltpu.CompilerParams(
            dimension_semantics=("parallel",),
        ),
        cost_estimate=cost,
    )(xc, w1c, b1c, w2t, b2c)


def init_params(key, d_in, hidden, n_heads):
    """Deterministic init mimicking torch.nn.Linear defaults (U[-1/sqrt(fan_in), ..])."""
    k1, k2, k3, k4 = jax.random.split(key, 4)
    lim1 = 1.0 / jnp.sqrt(d_in)
    lim2 = 1.0 / jnp.sqrt(hidden)
    w1 = jax.random.uniform(k1, (d_in, hidden), jnp.float32, -lim1, lim1)
    b1 = jax.random.uniform(k2, (1, hidden), jnp.float32, -lim1, lim1)
    w2 = jax.random.uniform(k3, (hidden, n_heads), jnp.float32, -lim2, lim2)
    b2 = jax.random.uniform(k4, (1, n_heads), jnp.float32, -lim2, lim2)
    return w1, b1, w2, b2


def reference(x, params):
    """Pure-JAX reference of the same forward pass."""
    w1, b1, w2, b2 = params
    h = jnp.tanh(x @ w1 + b1)
    heads = h @ w2 + b2                 # [B, K]
    return jnp.moveaxis(heads, -1, 0)   # [K, B]


if __name__ == "__main__":
    D, H, K = 32, 64, 16
    key = jax.random.PRNGKey(0)
    kx, kp = jax.random.split(key)
    params = init_params(kp, D, H, K)

    # 1) Tiny batch (original module size): single block, TB == B path.
    x_small = jax.random.normal(kx, (8, D), dtype=jnp.float32)
    out_small = jax.block_until_ready(transition_function(x_small, params, k=4))
    ref_small = reference(x_small, params)
    assert out_small.shape == (K, 8), out_small.shape
    assert jnp.allclose(out_small, ref_small, atol=1e-5, rtol=1e-5), \
        float(jnp.max(jnp.abs(out_small - ref_small)))

    # 2) Batched evaluation: 4 lane-dense tiles of 128 over a "parallel" grid
    #    (amortizes launch overhead, enables pipelining / megacore on v7x).
    x_big = jax.random.normal(kx, (512, D), dtype=jnp.float32)
    out_big = jax.block_until_ready(
        transition_function(x_big, params, k=4, block_b=128))
    ref_big = reference(x_big, params)
    assert out_big.shape == (K, 512), out_big.shape
    assert jnp.allclose(out_big, ref_big, atol=1e-5, rtol=1e-5), \
        float(jnp.max(jnp.abs(out_big - ref_big)))

    # 3) bf16 MXU operands (v6e/v7x fast path), f32 accumulation; verify against
    #    the f32 reference with a loosened tolerance.
    out_bf16 = jax.block_until_ready(
        transition_function(x_big, params, k=4, compute_dtype=jnp.bfloat16,
                            block_b=128))
    assert out_bf16.shape == (K, 512), out_bf16.shape
    assert jnp.allclose(out_bf16, ref_big, atol=5e-2, rtol=5e-2), \
        float(jnp.max(jnp.abs(out_bf16 - ref_big)))

    # TODO(synk): SamplingOneToManyNetwork (encoder->sampler->decoder) path is
    # not instantiated here; only the deterministic OneToManyNetwork path is.

    print("KERNEL_OK")
</pallas_src>

<mosaic_0001>
module attributes {stable_mosaic.version = 11 : i64} {
  func.func @_transition_kernel(%arg0: i32, %arg1: memref<8x32xf32, #tpu.memory_space<vmem>>, %arg2: memref<32x64xf32, #tpu.memory_space<vmem>>, %arg3: memref<1x64xf32, #tpu.memory_space<vmem>>, %arg4: memref<16x64xf32, #tpu.memory_space<vmem>>, %arg5: memref<16x1xf32, #tpu.memory_space<vmem>>, %arg6: memref<16x8xf32, #tpu.memory_space<vmem>>) attributes {dimension_semantics = [#tpu.dimension_semantics<parallel>], iteration_bounds = array<i64: 1>, scalar_prefetch = 0 : i64, scratch_operands = 0 : i64, tpu.core_type = #tpu.core_type<tc>, window_params = [{transform_indices = @transform_0, window_bounds = array<i64: 8, 32>}, {pipeline_mode = #tpu.pipeline_mode<synchronous>, transform_indices = @transform_1, window_bounds = array<i64: 32, 64>}, {pipeline_mode = #tpu.pipeline_mode<synchronous>, transform_indices = @transform_2, window_bounds = array<i64: 1, 64>}, {pipeline_mode = #tpu.pipeline_mode<synchronous>, transform_indices = @transform_3, window_bounds = array<i64: 16, 64>}, {pipeline_mode = #tpu.pipeline_mode<synchronous>, transform_indices = @transform_4, window_bounds = array<i64: 16, 1>}, {transform_indices = @transform_5, window_bounds = array<i64: 16, 8>}]} {
    %c0 = arith.constant 0 : index
    %c0_0 = arith.constant 0 : index
    %0 = vector.load %arg1[%c0, %c0_0] : memref<8x32xf32, #tpu.memory_space<vmem>>, vector<8x32xf32>
    %c0_1 = arith.constant 0 : index
    %c0_2 = arith.constant 0 : index
    %1 = vector.load %arg2[%c0_1, %c0_2] : memref<32x64xf32, #tpu.memory_space<vmem>>, vector<32x64xf32>
    %cst = arith.constant dense<0.000000e+00> : vector<8x64xf32>
    %2 = tpu.matmul %0, %1, %cst {dimension_numbers = #tpu.dot_dimension_numbers<[1], [0], [0], [1], [0, 0, 1, 1], [], []>} : vector<8x32xf32>, vector<32x64xf32>, vector<8x64xf32> -> vector<8x64xf32>
    %c0_3 = arith.constant 0 : index
    %c0_4 = arith.constant 0 : index
    %3 = vector.load %arg3[%c0_3, %c0_4] : memref<1x64xf32, #tpu.memory_space<vmem>>, vector<1x64xf32>
    %4 = vector.broadcast %3 : vector<1x64xf32> to vector<8x64xf32>
    %5 = arith.addf %2, %4 : vector<8x64xf32>
    %6 = math.tanh %5 : vector<8x64xf32>
    %c0_5 = arith.constant 0 : index
    %c0_6 = arith.constant 0 : index
    %7 = vector.load %arg4[%c0_5, %c0_6] : memref<16x64xf32, #tpu.memory_space<vmem>>, vector<16x64xf32>
    %cst_7 = arith.constant dense<0.000000e+00> : vector<16x8xf32>
    %8 = tpu.matmul %7, %6, %cst_7 {dimension_numbers = #tpu.dot_dimension_numbers<[1], [1], [0], [0], [0, 0, 1, 0], [], []>} : vector<16x64xf32>, vector<8x64xf32>, vector<16x8xf32> -> vector<16x8xf32>
    %c0_8 = arith.constant 0 : index
    %c0_9 = arith.constant 0 : index
    %9 = vector.load %arg5[%c0_8, %c0_9] : memref<16x1xf32, #tpu.memory_space<vmem>>, vector<16x1xf32>
    %10 = vector.broadcast %9 : vector<16x1xf32> to vector<16x8xf32>
    %11 = arith.addf %8, %10 : vector<16x8xf32>
    %c0_10 = arith.constant 0 : index
    %c0_11 = arith.constant 0 : index
    %12 = vector.load %arg6[%c0_10, %c0_11] : memref<16x8xf32, #tpu.memory_space<vmem>>, vector<16x8xf32>
    tpu.vector_store %arg6[%c0_10, %c0_11], %11 {strides = array<i32>} : memref<16x8xf32, #tpu.memory_space<vmem>>, vector<16x8xf32>,
    return
  }
  func.func @transform_0(%arg0: i32) -> (i32, i32) {
    %c0_i32 = arith.constant 0 : i32
    %c0_i32_0 = arith.constant 0 : i32
    return %arg0, %c0_i32 : i32, i32
  }
  func.func @transform_1(%arg0: i32) -> (i32, i32) {
    %c0_i32 = arith.constant 0 : i32
    %c0_i32_0 = arith.constant 0 : i32
    %c0_i32_1 = arith.constant 0 : i32
    return %c0_i32, %c0_i32_0 : i32, i32
  }
  func.func @transform_2(%arg0: i32) -> (i32, i32) {
    %c0_i32 = arith.constant 0 : i32
    %c0_i32_0 = arith.constant 0 : i32
    %c0_i32_1 = arith.constant 0 : i32
    return %c0_i32, %c0_i32_0 : i32, i32
  }
  func.func @transform_3(%arg0: i32) -> (i32, i32) {
    %c0_i32 = arith.constant 0 : i32
    %c0_i32_0 = arith.constant 0 : i32
    %c0_i32_1 = arith.constant 0 : i32
    return %c0_i32, %c0_i32_0 : i32, i32
  }
  func.func @transform_4(%arg0: i32) -> (i32, i32) {
    %c0_i32 = arith.constant 0 : i32
    %c0_i32_0 = arith.constant 0 : i32
    %c0_i32_1 = arith.constant 0 : i32
    return %c0_i32, %c0_i32_0 : i32, i32
  }
  func.func @transform_5(%arg0: i32) -> (i32, i32) {
    %c0_i32 = arith.constant 0 : i32
    %c0_i32_0 = arith.constant 0 : i32
    return %c0_i32, %arg0 : i32, i32
  }
}

</mosaic_0001>

<llo_original>
// kernel: tpu_custom_call.1
$region0: #{tpu_custom_call.1}
  #allocation0 [shape = 'u32[]', space=smem, size = 0x4, offset = 0x4, fixed_abs, tag = 'smem constant byte address 0x4 - core index']
  #allocation1 [shape = 'u32[144,128]{1,0:T(1,128)}', space=vmem, size = 0x12000, scoped, tag = 'internal scratch']
  %s0 = inlined_call_operand.vmem [shape: f32[8,32], index: 0, kind: input, shape index: {}]
  %s1 = inlined_call_operand.hbm [shape: f32[32,64], index: 1, kind: input, shape index: {}]
  %s2 = inlined_call_operand.vmem [shape: f32[1,64], index: 2, kind: input, shape index: {}]
  %s3 = inlined_call_operand.vmem [shape: f32[16,64], index: 3, kind: input, shape index: {}]
  %s4 = inlined_call_operand.vmem [shape: f32[16,1], index: 4, kind: input, shape index: {}]
  %s5 = inlined_call_operand.vmem [shape: f32[16,8], index: 5, kind: output, shape index: {}]
  %s6 = sld [smem:[#allocation0]]
  $region34: #{tpu_custom_call.1} parent=0
    _
  %s8 = ssub.s32 1, %s6
  %s9 = scalar_select 0, %s8, %s6
  $region1: #{tpu_custom_call.1} parent=0
    #allocation2 [shape = 'u8[16384]{0}', space=vmem, size = 0x4000, scoped, tag = 'input window, operand 1, single buffered']
    #allocation3 [shape = 's32[1]{0}', space=sflag, size = 0x4, scoped, tag = 'scoped memory for tpu_custom_call.1']
    %10 = vsyncpa [#allocation3], 0
    // Predicated region
    $region2: #{tpu_custom_call.1} parent=1 // pred_check
      _
    $region3: #{tpu_custom_call.1} parent=1 // pred_check_branch
      %12 = sbr.rel (0) target = $region5
    $region4: #{tpu_custom_call.1} parent=1 // pred_region
      _
    $region5: #{tpu_custom_call.1} parent=1 // pred_fallthru
      _
    // Predicated region
    $region6: #{tpu_custom_call.1} parent=1 // pred_check
      _
    $region7: #{tpu_custom_call.1} parent=1 // pred_check_branch
      %14 = sbr.rel (0) target = $region9
    $region8: #{tpu_custom_call.1} parent=1 // pred_region
      %s16 = ssub.s32 512, 512
      %17 = vsyncadd [#allocation3], %s16
      %s18 = sshll.u32 [#allocation2], 4
      %s19 = int_to_ptr.vmem [resolvable:$true] %s18
      %24 = dma.hbm_to_vmem [thread:$0]  %s1, 512, %s19, [#allocation3], 128, 128, 8
    $region9: #{tpu_custom_call.1} parent=1 // pred_fallthru
      _
    // Predicated region
    $region10: #{tpu_custom_call.1} parent=1 // pred_check
      _
    $region11: #{tpu_custom_call.1} parent=1 // pred_check_branch
      %26 = sbr.rel (0) target = $region13
    $region12: #{tpu_custom_call.1} parent=1 // pred_region
      _
    $region13: #{tpu_custom_call.1} parent=1 // pred_fallthru
      _
    // Predicated region
    $region14: #{tpu_custom_call.1} parent=1 // pred_check
      _
    $region15: #{tpu_custom_call.1} parent=1 // pred_check_branch
      %28 = sbr.rel (0) target = $region17
    $region16: #{tpu_custom_call.1} parent=1 // pred_region
      _
    $region17: #{tpu_custom_call.1} parent=1 // pred_fallthru
      _
    // Predicated region
    $region18: #{tpu_custom_call.1} parent=1 // pred_check
      _
    $region19: #{tpu_custom_call.1} parent=1 // pred_check_branch
      %30 = sbr.rel (0) target = $region21
    $region20: #{tpu_custom_call.1} parent=1 // pred_region
      _
    $region21: #{tpu_custom_call.1} parent=1 // pred_fallthru
      _
    // Predicated region
    $region22: #{tpu_custom_call.1} parent=1 // pred_check
      _
    $region23: #{tpu_custom_call.1} parent=1 // pred_check_branch
      %32 = sbr.rel (0) target = $region25
    $region24: #{tpu_custom_call.1} parent=1 // pred_region
      %33 = dma.done [#allocation3], 512
    $region25: #{tpu_custom_call.1} parent=1 // pred_fallthru
      _
    %v34 = vld [vmem:[%s0] sm:$0xff]
    %v35 = vld [vmem:[#allocation2] sm:$0xff]
    %v36 = vld [vmem:[#allocation2 + $0x8] sm:$0xff]
    %v37 = vld [vmem:[#allocation2 + $0x10] sm:$0xff]
    %v38 = vld [vmem:[#allocation2 + $0x18] sm:$0xff]
    %v39 = vld [vmem:[%s2] sm:$0x1]
    %v41 = vlaneseq
    %v42 = vshrl.u32 %v41, 7
    %v43 = vsub.s32 0, %v42
    %v44 = vrot.slane %v39, %v43
    %vm46 = vcmask 261120
    %v48 = vsel %vm46, %v34, 0
    %50 = vmatprep.subr.mxu0 0.0
    %51 = vmatpush1.msra.mxu0 %v35
    %52 = vmatprep.subr.mxu0 0.0
    %53 = vmatpush1.msra.mxu0 %v36
    %54 = vmatprep.subr.mxu0 0.0
    %55 = vmatpush1.msra.mxu0 %v37
    %56 = vmatprep.subr.mxu0 0.0
    %57 = vmatpush1.msra.mxu0 %v38
    %58 = vmatprep.subr.mxu0 0.0
    %59 = vmatpush1.msra.mxu0 0.0
    %60 = vmatprep.subr.mxu0 0.0
    %61 = vmatpush1.msra.mxu0 0.0
    %62 = vmatprep.subr.mxu0 0.0
    %63 = vmatpush1.msra.mxu0 0.0
    %64 = vmatprep.subr.mxu0 0.0
    %65 = vmatpush1.msra.mxu0 0.0
    %66 = vmatprep.subr.mxu0 0.0
    %67 = vmatpush1.msra.mxu0 0.0
    %68 = vmatprep.subr.mxu0 0.0
    %69 = vmatpush1.msra.mxu0 0.0
    %70 = vmatprep.subr.mxu0 0.0
    %71 = vmatpush1.msra.mxu0 0.0
    %72 = vmatprep.subr.mxu0 0.0
    %73 = vmatpush1.msra.mxu0 0.0
    %74 = vmatprep.subr.mxu0 0.0
    %75 = vmatpush1.msra.mxu0 0.0
    %76 = vmatprep.subr.mxu0 0.0
    %77 = vmatpush1.msra.mxu0 0.0
    %78 = vmatprep.subr.mxu0 0.0
    %79 = vmatpush1.msra.mxu0 0.0
    %80 = vmatprep.subr.mxu0 0.0
    %81 = vmatpush1.msra.mxu0 0.0
    %82 = vmatprep.subr.mxu0 0.0
    %83 = vmatpush1.msra.mxu0 0.0
    %84 = vmatprep.subr.mxu0 0.0
    %85 = vmatpush1.msra.mxu0 0.0
    %86 = vmatprep.subr.mxu0 0.0
    %87 = vmatpush1.msra.mxu0 0.0
    %88 = vmatprep.subr.mxu0 0.0
    %89 = vmatpush1.msra.mxu0 0.0
    %90 = vmatprep.subr.mxu0 0.0
    %91 = vmatpush1.msra.mxu0 0.0
    %92 = vmatprep.subr.mxu0 0.0
    %93 = vmatpush1.msra.mxu0 0.0
    %94 = vmatprep.subr.mxu0 0.0
    %95 = vmatpush1.msra.mxu0 0.0
    %96 = vmatprep.subr.mxu0 0.0
    %97 = vmatpush1.msra.mxu0 0.0
    %98 = vmatprep.subr.mxu0 0.0
    %99 = vmatpush1.msra.mxu0 0.0
    %100 = vmatprep.subr.mxu0 0.0
    %101 = vmatpush1.msra.mxu0 0.0
    %102 = vmatprep.subr.mxu0 0.0
    %103 = vmatpush1.msra.mxu0 0.0
    %104 = vmatprep.subr.mxu0 0.0
    %105 = vmatpush1.msra.mxu0 0.0
    %106 = vmatprep.subr.mxu0 0.0
    %107 = vmatpush1.msra.mxu0 0.0
    %108 = vmatprep.subr.mxu0 0.0
    %109 = vmatpush1.msra.mxu0 0.0
    %110 = vmatprep.subr.mxu0 0.0
    %111 = vmatpush1.msra.mxu0 0.0
    %112 = vmatprep.subr.mxu0 0.0
    %113 = vmatpush1.msra.mxu0 0.0
    %114 = vmatprep.mubr.f32.mxu0 0.0
    %115 = vmatmul.mubr.f32.gmra.mrb[0].mxu0 %v48
    %v116 = vpop.f32.mrb[0].mxu0
    %v117 = vadd.f32 %v44, %v116
    %v118 = vpop.f32.mrb[0].mxu0
    %119 = vdwg.mxu0
    %v120 = vtanh.pop %v117
    %v121 = vld [vmem:[%s3] sm:$0xff]
    %v122 = vld [vmem:[%s3 + $0x8] sm:$0xff]
    %v123 = vld [vmem:[%s4] sm:$0xff]
    %v124 = vld [vmem:[%s4 + $0x8] sm:$0xff]
    %126 = vset.pattern.permute.xlu0 0
    %127 = vperm.xlu0 %126, %v123
    %v128 = vpop.permute.xlu0 %127
    %131 = vset.pattern.permute.xlu0 0
    %132 = vperm.xlu0 %131, %v124
    %v133 = vpop.permute.xlu0 %132
    %vm135 = vcmask 523264
    %v137 = vsel %vm135, %v121, 0
    %v140 = vsel %vm135, %v122, 0
    %v143 = vsel %vm135, %v120, 0
    %145 = vmatprep.subr.mxu0 0.0
    %146 = vmatpush1.xpose.msra.mxu0 %v143
    %147 = vmatprep.subr.mxu0 0.0
    %148 = vmatpush1.xpose.msra.mxu0 0.0
    %149 = vmatprep.subr.mxu0 0.0
    %150 = vmatpush1.xpose.msra.mxu0 0.0
    %151 = vmatprep.subr.mxu0 0.0
    %152 = vmatpush1.xpose.msra.mxu0 0.0
    %153 = vmatprep.subr.mxu0 0.0
    %154 = vmatpush1.xpose.msra.mxu0 0.0
    %155 = vmatprep.subr.mxu0 0.0
    %156 = vmatpush1.xpose.msra.mxu0 0.0
    %157 = vmatprep.subr.mxu0 0.0
    %158 = vmatpush1.xpose.msra.mxu0 0.0
    %159 = vmatprep.subr.mxu0 0.0
    %160 = vmatpush1.xpose.msra.mxu0 0.0
    %161 = vmatprep.subr.mxu0 0.0
    %162 = vmatpush1.xpose.msra.mxu0 0.0
    %163 = vmatprep.subr.mxu0 0.0
    %164 = vmatpush1.xpose.msra.mxu0 0.0
    %165 = vmatprep.subr.mxu0 0.0
    %166 = vmatpush1.xpose.msra.mxu0 0.0
    %167 = vmatprep.subr.mxu0 0.0
    %168 = vmatpush1.xpose.msra.mxu0 0.0
    %169 = vmatprep.subr.mxu0 0.0
    %170 = vmatpush1.xpose.msra.mxu0 0.0
    %171 = vmatprep.subr.mxu0 0.0
    %172 = vmatpush1.xpose.msra.mxu0 0.0
    %173 = vmatprep.subr.mxu0 0.0
    %174 = vmatpush1.xpose.msra.mxu0 0.0
    %175 = vmatprep.subr.mxu0 0.0
    %176 = vmatpush1.xpose.msra.mxu0 0.0
    %177 = vmatprep.subr.mxu0 0.0
    %178 = vmatpush1.xpose.msra.mxu0 0.0
    %179 = vmatprep.subr.mxu0 0.0
    %180 = vmatpush1.xpose.msra.mxu0 0.0
    %181 = vmatprep.subr.mxu0 0.0
    %182 = vmatpush1.xpose.msra.mxu0 0.0
    %183 = vmatprep.subr.mxu0 0.0
    %184 = vmatpush1.xpose.msra.mxu0 0.0
    %185 = vmatprep.subr.mxu0 0.0
    %186 = vmatpush1.xpose.msra.mxu0 0.0
    %187 = vmatprep.subr.mxu0 0.0
    %188 = vmatpush1.xpose.msra.mxu0 0.0
    %189 = vmatprep.subr.mxu0 0.0
    %190 = vmatpush1.xpose.msra.mxu0 0.0
    %191 = vmatprep.subr.mxu0 0.0
    %192 = vmatpush1.xpose.msra.mxu0 0.0
    %193 = vmatprep.subr.mxu0 0.0
    %194 = vmatpush1.xpose.msra.mxu0 0.0
    %195 = vmatprep.subr.mxu0 0.0
    %196 = vmatpush1.xpose.msra.mxu0 0.0
    %197 = vmatprep.subr.mxu0 0.0
    %198 = vmatpush1.xpose.msra.mxu0 0.0
    %199 = vmatprep.subr.mxu0 0.0
    %200 = vmatpush1.xpose.msra.mxu0 0.0
    %201 = vmatprep.subr.mxu0 0.0
    %202 = vmatpush1.xpose.msra.mxu0 0.0
    %203 = vmatprep.subr.mxu0 0.0
    %204 = vmatpush1.xpose.msra.mxu0 0.0
    %205 = vmatprep.subr.mxu0 0.0
    %206 = vmatpush1.xpose.msra.mxu0 0.0
    %207 = vmatprep.subr.mxu0 0.0
    %208 = vmatpush1.xpose.msra.mxu0 0.0
    %209 = vmatprep.mubr.f32.mxu0 0.0
    %210 = vmatmul.mubr.f32.gmra.mrb[0].mxu0 %v137
    %v211 = vpop.f32.mrb[0].mxu0
    %v212 = vadd.f32 %v128, %v211
    %v213 = vpop.f32.mrb[0].mxu0
    %214 = vmatprep.mubr.f32.mxu0 0.0
    %215 = vmatmul.mubr.f32.gmra.mrb[0].mxu0 %v140
    %v216 = vpop.f32.mrb[0].mxu0
    %v217 = vadd.f32 %v133, %v216
    %v218 = vpop.f32.mrb[0].mxu0
    %219 = vdwg.mxu0
    %vm220 = vcmask 64512
    %221 = vst.msk [vmem:[%s5] sm:$0xff] %vm220, %v212
    %222 = vst.msk [vmem:[%s5 + $0x8] sm:$0xff] %vm220, %v217
    // Predicated region
    $region26: #{tpu_custom_call.1} parent=1 // pred_check
      _
    $region27: #{tpu_custom_call.1} parent=1 // pred_check_branch
      %224 = sbr.rel (0) target = $region29
    $region28: #{tpu_custom_call.1} parent=1 // pred_region
      _
    $region29: #{tpu_custom_call.1} parent=1 // pred_fallthru
      _
    // Predicated region
    $region30: #{tpu_custom_call.1} parent=1 // pred_check
      _
    $region31: #{tpu_custom_call.1} parent=1 // pred_check_branch
      %226 = sbr.rel (0) target = $region33
    $region32: #{tpu_custom_call.1} parent=1 // pred_region
      _
    $region33: #{tpu_custom_call.1} parent=1 // pred_fallthru
      _
    %227 = vsyncpa [#allocation3], 1

</llo_original>
